<compile_context>
chip_gen: v7x
topology: tpu7x:2x2x1
jax: 0.10.0
libtpu: 0.0.40
codegen_flags: <defaults>
</compile_context>

<pallas_src>
import jax
import jax.numpy as jnp
from jax.experimental import pallas as pl
from jax.experimental.pallas import tpu as pltpu


LANE = 128          # lane (fast) dimension of a vreg
ROW_ALIGN = 32      # LCM of sublane packing for f32(8)/bf16(16)/int8(32)
BLK_R = 2048        # rows per tile: 2048x128 f32 = 1 MiB per buffer


def _binary_mask_kernel(w_ref, m_ref, o_ref):
    # Elementwise masked select: mask is int8 (0/1); select rides free VPU slack.
    w = w_ref[...]
    m = m_ref[...]
    o_ref[...] = jnp.where(m != 0, w, jnp.zeros_like(w))


def apply_binary_mask(weight: jax.Array, binary_mask: jax.Array) -> jax.Array:
    """Pallas implementation of BinaryMask.forward(weight).

    `binary_mask` may be any dtype (int8 preferred); zeros mask out the weight.
    """
    assert weight.shape == binary_mask.shape, "mask must match weight shape"
    orig_shape = weight.shape
    n = weight.size

    tile_elems = LANE * ROW_ALIGN
    n_pad = pl.cdiv(n, tile_elems) * tile_elems
    pad = n_pad - n

    w_flat = jnp.ravel(weight)
    m_flat = jnp.ravel(binary_mask)
    if pad:
        # Only materialize padded copies when the size is not tile-aligned.
        w_flat = jnp.pad(w_flat, (0, pad))
        m_flat = jnp.pad(m_flat, (0, pad))

    rows = n_pad // LANE           # multiple of ROW_ALIGN
    blk_r = min(BLK_R, rows)       # still a multiple of ROW_ALIGN
    grid = (pl.cdiv(rows, blk_r),)

    w2d = w_flat.reshape(rows, LANE)
    m2d = m_flat.reshape(rows, LANE)

    out2d = pl.pallas_call(
        _binary_mask_kernel,
        out_shape=jax.ShapeDtypeStruct((rows, LANE), weight.dtype),
        grid_spec=pltpu.PrefetchScalarGridSpec(
            num_scalar_prefetch=0,
            grid=grid,
            in_specs=[
                pl.BlockSpec((blk_r, LANE), lambda i: (i, 0)),
                pl.BlockSpec((blk_r, LANE), lambda i: (i, 0)),
            ],
            out_specs=pl.BlockSpec((blk_r, LANE), lambda i: (i, 0)),
        ),
        compiler_params=pltpu.CompilerParams(
            dimension_semantics=("parallel",),
        ),
    )(w2d, m2d)

    out = out2d.reshape(-1)
    if pad:
        out = out[:n]
    return out.reshape(orig_shape)


class BinaryMaskPallas:
    """JAX counterpart of nncf BinaryMask: holds a mask buffer (init = ones)."""

    def __init__(self, shape):
        self.shape = tuple(shape)
        self.frozen = False
        self._binary_mask = jnp.ones(self.shape, dtype=jnp.float32)
        # int8 copy cached once per mask update (not per forward) to cut
        # per-forward mask HBM read traffic 4x.
        self._mask_i8 = jnp.ones(self.shape, dtype=jnp.int8)

    @property
    def binary_mask(self):
        return self._binary_mask

    @binary_mask.setter
    def binary_mask(self, tensor):
        self._binary_mask = tensor
        self._mask_i8 = (tensor != 0).astype(jnp.int8)

    def _calc_training_binary_mask(self, weight):
        # In BinaryMask this just returns the stored mask.
        return self._binary_mask

    def apply_binary_mask(self, weight):
        return apply_binary_mask(weight, self._mask_i8)

    def __call__(self, weight):
        return apply_binary_mask(weight, self._mask_i8)


if __name__ == "__main__":
    key = jax.random.PRNGKey(0)
    k_w, k_m = jax.random.split(key)

    # weight shaped like a small conv weight: (2, 4, 16, 16)
    w_shape = (2, 4, 16, 16)
    weight = jax.random.normal(k_w, w_shape, dtype=jnp.float32)

    module = BinaryMaskPallas(w_shape)

    # Buffer starts as ones (register_buffer(torch.ones(shape))); simulate a
    # mask update through the setter so the test actually exercises masking.
    module.binary_mask = (jax.random.uniform(k_m, w_shape) > 0.5).astype(jnp.float32)

    out = module(weight)
    out = jax.block_until_ready(out)

    expected = weight * module.binary_mask
    assert out.shape == w_shape
    assert out.dtype == weight.dtype
    assert jnp.allclose(out, expected), "mismatch vs reference elementwise multiply"

    # Also check the all-ones (freshly constructed) path: forward == identity.
    fresh = BinaryMaskPallas(w_shape)
    out_id = jax.block_until_ready(fresh(weight))
    assert jnp.allclose(out_id, weight), "identity (all-ones mask) path mismatch"

    print("KERNEL_OK")
</pallas_src>

<mosaic_0001>
module attributes {stable_mosaic.version = 11 : i64} {
  func.func @_binary_mask_kernel(%arg0: i32, %arg1: memref<32x128xf32, #tpu.memory_space<vmem>>, %arg2: memref<32x128xi8, #tpu.memory_space<vmem>>, %arg3: memref<32x128xf32, #tpu.memory_space<vmem>>) attributes {dimension_semantics = [#tpu.dimension_semantics<parallel>], iteration_bounds = array<i64: 1>, scalar_prefetch = 0 : i64, scratch_operands = 0 : i64, tpu.core_type = #tpu.core_type<tc>, window_params = [{transform_indices = @transform_0, window_bounds = array<i64: 32, 128>}, {transform_indices = @transform_1, window_bounds = array<i64: 32, 128>}, {transform_indices = @transform_2, window_bounds = array<i64: 32, 128>}]} {
    %c0 = arith.constant 0 : index
    %c0_0 = arith.constant 0 : index
    %0 = vector.load %arg1[%c0, %c0_0] : memref<32x128xf32, #tpu.memory_space<vmem>>, vector<32x128xf32>
    %c0_1 = arith.constant 0 : index
    %c0_2 = arith.constant 0 : index
    %1 = vector.load %arg2[%c0_1, %c0_2] : memref<32x128xi8, #tpu.memory_space<vmem>>, vector<32x128xi8>
    %c0_i8 = arith.constant 0 : i8
    %2 = vector.broadcast %c0_i8 : i8 to vector<32x128xi8>
    %3 = arith.cmpi ne, %1, %2 : vector<32x128xi8>
    %cst = arith.constant 0.000000e+00 : f32
    %4 = vector.broadcast %cst : f32 to vector<32x128xf32>
    %5 = arith.select %3, %0, %4 : vector<32x128xi1>, vector<32x128xf32>
    %c0_3 = arith.constant 0 : index
    %c0_4 = arith.constant 0 : index
    %6 = vector.load %arg3[%c0_3, %c0_4] : memref<32x128xf32, #tpu.memory_space<vmem>>, vector<32x128xf32>
    tpu.vector_store %arg3[%c0_3, %c0_4], %5 {strides = array<i32>} : memref<32x128xf32, #tpu.memory_space<vmem>>, vector<32x128xf32>,
    return
  }
  func.func @transform_0(%arg0: i32) -> (i32, i32) {
    %c0_i32 = arith.constant 0 : i32
    %c0_i32_0 = arith.constant 0 : i32
    return %arg0, %c0_i32 : i32, i32
  }
  func.func @transform_1(%arg0: i32) -> (i32, i32) {
    %c0_i32 = arith.constant 0 : i32
    %c0_i32_0 = arith.constant 0 : i32
    return %arg0, %c0_i32 : i32, i32
  }
  func.func @transform_2(%arg0: i32) -> (i32, i32) {
    %c0_i32 = arith.constant 0 : i32
    %c0_i32_0 = arith.constant 0 : i32
    return %arg0, %c0_i32 : i32, i32
  }
}

</mosaic_0001>

<llo_original>
// kernel: tpu_custom_call.1
$region0: #{tpu_custom_call.1}
  #allocation0 [shape = 'u32[]', space=smem, size = 0x4, offset = 0x4, fixed_abs, tag = 'smem constant byte address 0x4 - core index']
  #allocation1 [shape = 'u32[144,128]{1,0:T(1,128)}', space=vmem, size = 0x12000, scoped, tag = 'internal scratch']
  %s0 = inlined_call_operand.hbm [shape: f32[32,128], index: 0, kind: input, shape index: {}]
  %s1 = inlined_call_operand.hbm [shape: s8[32,128], index: 1, kind: input, shape index: {}]
  %s2 = inlined_call_operand.hbm [shape: f32[32,128], index: 2, kind: output, shape index: {}]
  %s3 = sld [smem:[#allocation0]]
  $region26: #{tpu_custom_call.1} parent=0
    _
  %s5 = ssub.s32 1, %s3
  %s6 = scalar_select 0, %s5, %s3
  $region1: #{tpu_custom_call.1} parent=0
    #allocation2 [shape = 'u8[16384]{0}', space=vmem, size = 0x4000, scoped, tag = 'input window, operand 0, single buffered']
    #allocation3 [shape = 's32[1]{0}', space=sflag, size = 0x4, scoped, tag = 'scoped memory for tpu_custom_call.1']
    #allocation4 [shape = 's32[1]{0}', space=sflag, size = 0x4, scoped, tag = 'scoped memory for tpu_custom_call.1']
    #allocation5 [shape = 'u8[4096]{0}', space=vmem, size = 0x1000, scoped, tag = 'input window, operand 1, single buffered']
    #allocation6 [shape = 's32[1]{0}', space=sflag, size = 0x4, scoped, tag = 'scoped memory for tpu_custom_call.1']
    #allocation7 [shape = 'u8[16384]{0}', space=vmem, size = 0x4000, scoped, tag = 'output window, operand 0, single buffered']
    %7 = vsyncpa [#allocation3], 0
    %8 = vsyncpa [#allocation6], 0
    %9 = vsyncpa [#allocation4], 0
    // Predicated region
    $region2: #{tpu_custom_call.1} parent=1 // pred_check
      _
    $region3: #{tpu_custom_call.1} parent=1 // pred_check_branch
      %11 = sbr.rel (0) target = $region5
    $region4: #{tpu_custom_call.1} parent=1 // pred_region
      %s13 = ssub.s32 512, 512
      %14 = vsyncadd [#allocation3], %s13
      %s15 = sshll.u32 [#allocation2], 4
      %s16 = int_to_ptr.vmem [resolvable:$true] %s15
      %21 = dma.hbm_to_vmem [thread:$0]  %s0, 512, %s16, [#allocation3], 128, 128, 8
    $region5: #{tpu_custom_call.1} parent=1 // pred_fallthru
      _
    // Predicated region
    $region6: #{tpu_custom_call.1} parent=1 // pred_check
      _
    $region7: #{tpu_custom_call.1} parent=1 // pred_check_branch
      %23 = sbr.rel (0) target = $region9
    $region8: #{tpu_custom_call.1} parent=1 // pred_region
      %s25 = ssub.s32 128, 128
      %26 = vsyncadd [#allocation6], %s25
      %s28 = sshll.u32 [#allocation5], 4
      %s29 = int_to_ptr.vmem [resolvable:$true] %s28
      %31 = dma.hbm_to_vmem [thread:$0]  %s1, 128, %s29, [#allocation6]
    $region9: #{tpu_custom_call.1} parent=1 // pred_fallthru
      _
    // Predicated region
    $region10: #{tpu_custom_call.1} parent=1 // pred_check
      _
    $region11: #{tpu_custom_call.1} parent=1 // pred_check_branch
      %33 = sbr.rel (0) target = $region13
    $region12: #{tpu_custom_call.1} parent=1 // pred_region
      %34 = dma.done [#allocation3], 512
    $region13: #{tpu_custom_call.1} parent=1 // pred_fallthru
      _
    // Predicated region
    $region14: #{tpu_custom_call.1} parent=1 // pred_check
      _
    $region15: #{tpu_custom_call.1} parent=1 // pred_check_branch
      %36 = sbr.rel (0) target = $region17
    $region16: #{tpu_custom_call.1} parent=1 // pred_region
      %37 = dma.done [#allocation6], 128
    $region17: #{tpu_custom_call.1} parent=1 // pred_fallthru
      _
    %v40 = vld [vmem:[#allocation2] sm:$0xff]
    %v41 = vld [vmem:[#allocation2 + $0x8] sm:$0xff]
    %v42 = vld [vmem:[#allocation2 + $0x10] sm:$0xff]
    %v43 = vld [vmem:[#allocation2 + $0x18] sm:$0xff]
    %v44 = vld [vmem:[#allocation5] sm:$0xff]
    %vm45 = vnez %v44
    %v46 = vsel %vm45, 16843009, 0
    %v47 = vunpack.c.0.s8 %v46
    %v48 = vunpack.c.1.s8 %v46
    %v49 = vunpack.c.2.s8 %v46
    %v50 = vunpack.c.3.s8 %v46
    %v51 = vpack.c.b16 %v47, %v47
    %v52 = vpack.c.b8 %v51, %v51
    %v53 = vpack.c.b16 %v48, %v48
    %v54 = vpack.c.b8 %v53, %v53
    %v55 = vpack.c.b16 %v49, %v49
    %v56 = vpack.c.b8 %v55, %v55
    %v57 = vpack.c.b16 %v50, %v50
    %v58 = vpack.c.b8 %v57, %v57
    %vm59 = vnez %v52
    %vm60 = vnez %v54
    %vm61 = vnez %v56
    %vm62 = vnez %v58
    %v63 = vsel %vm59, 16843009, 0
    %v64 = vsel %vm60, 16843009, 0
    %v65 = vsel %vm61, 16843009, 0
    %v66 = vsel %vm62, 16843009, 0
    %v67 = vunpack.c.0.s8 %v63
    %v68 = vunpack.c.0.s8 %v64
    %v69 = vunpack.c.0.s8 %v65
    %v70 = vunpack.c.0.s8 %v66
    %vm71 = vcmp.ne.s32.totalorder %v67, 0
    %vm72 = vcmp.ne.s32.totalorder %v68, 0
    %vm73 = vcmp.ne.s32.totalorder %v69, 0
    %vm74 = vcmp.ne.s32.totalorder %v70, 0
    %v75 = vsel %vm71, %v40, 0.0
    %v76 = vsel %vm72, %v41, 0.0
    %v77 = vsel %vm73, %v42, 0.0
    %v78 = vsel %vm74, %v43, 0.0
    %79 = vst [vmem:[#allocation7] sm:$0xff] %v75
    %80 = vst [vmem:[#allocation7 + $0x8] sm:$0xff] %v76
    %81 = vst [vmem:[#allocation7 + $0x10] sm:$0xff] %v77
    %82 = vst [vmem:[#allocation7 + $0x18] sm:$0xff] %v78
    // Predicated region
    $region18: #{tpu_custom_call.1} parent=1 // pred_check
      _
    $region19: #{tpu_custom_call.1} parent=1 // pred_check_branch
      %84 = sbr.rel (0) target = $region21
    $region20: #{tpu_custom_call.1} parent=1 // pred_region
      %s86 = ssub.s32 512, 512
      %87 = vsyncadd [#allocation4], %s86
      %s88 = sshll.u32 [#allocation7], 4
      %s89 = int_to_ptr.vmem [resolvable:$true] %s88
      %94 = dma.vmem_to_hbm [thread:$0]  %s89, 512, %s2, [#allocation4], 128, 128, 8
    $region21: #{tpu_custom_call.1} parent=1 // pred_fallthru
      _
    // Predicated region
    $region22: #{tpu_custom_call.1} parent=1 // pred_check
      _
    $region23: #{tpu_custom_call.1} parent=1 // pred_check_branch
      %96 = sbr.rel (0) target = $region25
    $region24: #{tpu_custom_call.1} parent=1 // pred_region
      %97 = dma.done [#allocation4], 512
    $region25: #{tpu_custom_call.1} parent=1 // pred_fallthru
      _
    %98 = vsyncpa [#allocation3], 1
    %99 = vsyncpa [#allocation6], 1
    %100 = vsyncpa [#allocation4], 1

</llo_original>
